<compile_context>
chip_gen: v6e
topology: v6e:2x2x1
jax: 0.10.0
libtpu: 0.0.40
codegen_flags: <defaults>
</compile_context>

<pallas_src>
import numpy as np
import jax
import jax.numpy as jnp
from jax.experimental import pallas as pl
from jax.experimental.pallas import tpu as pltpu


def _round_up(n, m):
    return -(-n // m) * m


# ---------------------------------------------------------------------------
# Kernel: 4 FC+ReLU layers + one fused (backcast ++ forecast) head.
# Grid is 1-D over batch tiles; weight refs are VMEM-resident across tiles.
# ---------------------------------------------------------------------------
def _symlet3_kernel(
    x_ref,
    w1_ref, b1_ref, w2_ref, b2_ref, w3_ref, b3_ref, w4_ref, b4_ref,
    wh_ref, bh_ref,
    out_ref,
):
    def fc_relu(h_bf16, w_ref, b_ref):
        # bf16 x bf16 on the MXU, f32 accumulation; bias-add + ReLU in f32 on the
        # VPU (v5e has no bf16 VPU path); store the activation back as bf16 once.
        y = jnp.dot(h_bf16, w_ref[...],
                    preferred_element_type=jnp.float32) + b_ref[...]
        return jnp.maximum(y, 0.0).astype(jnp.bfloat16)

    h = fc_relu(x_ref[...].astype(jnp.bfloat16), w1_ref, b1_ref)
    h = fc_relu(h, w2_ref, b2_ref)
    h = fc_relu(h, w3_ref, b3_ref)
    h = fc_relu(h, w4_ref, b4_ref)

    # Fused heads (basis + down-sample folded in, columns zero-padded to a
    # multiple of 128): lane-dense store, f32 output.
    out_ref[...] = (
        jnp.dot(h, wh_ref[...], preferred_element_type=jnp.float32)
        + bh_ref[...]
    )


def symlet3_wavelet_forward(x, params, *, backcast_length, batch_tile=None):
    """x: [B, backcast_length] (f32 or bf16) -> (backcast [B, Lb], forecast [B, Lf])."""
    B, L = x.shape
    wh = params["w_heads"]
    out_w_pad = wh.shape[1]          # padded to a multiple of 128 lanes
    out_w = params["out_width"]      # true backcast_length + forecast_length

    if batch_tile is None:
        if B <= 256:
            # Single tile: with ~0.35us per grid step, tiny tiles are pure
            # loop overhead.  Round to 16 rows (bf16 sublane packing).
            batch_tile = _round_up(max(B, 16), 16)
        else:
            # 256-row tiles: fills bf16 sublanes, keeps >=2 parallel grid steps
            # (both v7x TensorCores busy) and stays v5e-VMEM-friendly.
            batch_tile = 256
    B_pad = _round_up(B, batch_tile)
    # NOTE: zero-padded batch rows produce bias+ReLU garbage that is sliced off
    # below; do not remove the [:B] slice or alias the padded output buffer.
    x_p = jnp.pad(x, ((0, B_pad - B), (0, 0))) if B_pad != B else x

    weights = (
        params["w1"], params["b1"], params["w2"], params["b2"],
        params["w3"], params["b3"], params["w4"], params["b4"],
        params["w_heads"], params["b_heads"],
    )

    def resident(a):  # same block every grid step -> stays resident in VMEM
        return pl.BlockSpec(a.shape, lambda i: (0, 0))

    # Working-set estimate (default 2-deep buffering on every operand).  Only
    # raise the scoped-VMEM limit when it would overflow v5e's 16 MiB default;
    # at small sizes this keeps the compiler defaults (headroom on v7x's 64 MiB).
    x_bytes = batch_tile * L * x_p.dtype.itemsize
    o_bytes = batch_tile * out_w_pad * 4
    w_bytes = sum(int(np.prod(a.shape)) * a.dtype.itemsize for a in weights)
    est = 2 * (x_bytes + o_bytes + w_bytes)
    compiler_kwargs = dict(dimension_semantics=("parallel",))
    if est > 14 * 1024 * 1024:
        compiler_kwargs["vmem_limit_bytes"] = int(min(2 * est, 48 * 1024 * 1024))

    out = pl.pallas_call(
        _symlet3_kernel,
        grid=(B_pad // batch_tile,),
        in_specs=[pl.BlockSpec((batch_tile, L), lambda i: (i, 0))]
                 + [resident(a) for a in weights],
        out_specs=pl.BlockSpec((batch_tile, out_w_pad), lambda i: (i, 0)),
        out_shape=jax.ShapeDtypeStruct((B_pad, out_w_pad), jnp.float32),
        compiler_params=pltpu.CompilerParams(**compiler_kwargs),
    )(x_p, *weights)

    out = out[:B, :out_w]
    return out[:, :backcast_length], out[:, backcast_length:]


# ---------------------------------------------------------------------------
# Parameter construction (PyTorch-Linear-style uniform init), weights stored
# as [in_features, out_features].  Wavelet basis + down-sample are folded
# exactly (float64) into one fused head weight/bias, zero-padded to 128 lanes;
# MXU operands are cast to bf16.  An unfused f32 copy is kept for validation.
# ---------------------------------------------------------------------------
def init_params(key, units, backcast_length, forecast_length, basis_dim=32):
    keys = jax.random.split(key, 14)

    def linear(kw, kb, fan_in, fan_out, bias=True):
        bound = 1.0 / np.sqrt(fan_in)
        w = jax.random.uniform(kw, (fan_in, fan_out), jnp.float32, -bound, bound)
        b = (jax.random.uniform(kb, (1, fan_out), jnp.float32, -bound, bound)
             if bias else None)
        return w, b

    w1, b1 = linear(keys[0], keys[1], backcast_length, units)
    w2, b2 = linear(keys[2], keys[3], units, units)
    w3, b3 = linear(keys[4], keys[5], units, units)
    w4, b4 = linear(keys[6], keys[7], units, units)
    wb, bb = linear(keys[8], keys[9], units, basis_dim)       # backcast_linear
    wf, bfc = linear(keys[10], keys[11], units, basis_dim)    # forecast_linear
    wdb, _ = linear(keys[12], None, basis_dim, backcast_length, bias=False)
    wdf, _ = linear(keys[13], None, basis_dim, forecast_length, bias=False)

    # TODO(synk): the true sym3 basis requires pywt.Wavelet('sym3').wavefun(level=10)
    # + scipy interp1d; phi/psi below are deterministic synthetic stand-ins, but the
    # square basis-matrix construction (np.roll loop) matches the PyTorch code.
    def make_basis(N):
        t = np.linspace(0.0, 1.0, N)
        new_phi = np.sin(2.0 * np.pi * 3.0 * t) * np.exp(-2.0 * t)
        new_psi = np.cos(2.0 * np.pi * 5.0 * t) * (1.0 - t)
        W = np.zeros((N, N), dtype=np.float64)
        for i in range(N):
            W[:, i] = (np.roll(new_phi, i)[:N] if i < N // 2
                       else np.roll(new_psi, i - N // 2)[:N])
        return W  # float64

    basis64 = make_basis(basis_dim)  # both _WaveletGenerators are identical

    # Fold the purely-linear tail into the head, exactly, in float64:
    #   (h @ Wb + bb) @ BASIS @ Wdown  ==  h @ (Wb@BASIS@Wdown) + (bb@BASIS@Wdown)
    def fold(w, b, down):
        w64 = np.asarray(w, np.float64) @ basis64 @ np.asarray(down, np.float64)
        b64 = np.asarray(b, np.float64) @ basis64 @ np.asarray(down, np.float64)
        return w64.astype(np.float32), b64.astype(np.float32)

    w_back, b_back = fold(wb, bb, wdb)
    w_fore, b_fore = fold(wf, bfc, wdf)

    out_w = backcast_length + forecast_length
    out_w_pad = _round_up(out_w, 128)   # lane-dense head: zero-pad columns to 128k
    w_heads = np.zeros((units, out_w_pad), np.float32)
    b_heads = np.zeros((1, out_w_pad), np.float32)
    w_heads[:, :out_w] = np.concatenate([w_back, w_fore], axis=1)
    b_heads[:, :out_w] = np.concatenate([b_back, b_fore], axis=1)

    bf16 = lambda a: jnp.asarray(a, jnp.bfloat16)
    params = dict(
        w1=bf16(w1), b1=b1, w2=bf16(w2), b2=b2,
        w3=bf16(w3), b3=b3, w4=bf16(w4), b4=b4,
        w_heads=bf16(w_heads), b_heads=jnp.asarray(b_heads),
        out_width=out_w,
    )
    # f32 unfused copies (PyTorch-faithful chain) for validation only.
    params["_f32_unfused"] = dict(
        w1=np.asarray(w1), b1=np.asarray(b1), w2=np.asarray(w2), b2=np.asarray(b2),
        w3=np.asarray(w3), b3=np.asarray(b3), w4=np.asarray(w4), b4=np.asarray(b4),
        wb=np.asarray(wb), bb=np.asarray(bb), wf=np.asarray(wf), bf=np.asarray(bfc),
        wdb=np.asarray(wdb), wdf=np.asarray(wdf),
        basis=basis64.astype(np.float32),
    )
    return params


# ---------------------------------------------------------------------------
# Reference 1: same folded bf16 weights / same precision recipe as the kernel
# (tight tolerance — validates the Pallas kernel itself).
# ---------------------------------------------------------------------------
def reference_forward_folded(x, p, backcast_length):
    def fc_relu(h, w, b):
        y = jnp.dot(h.astype(w.dtype), w,
                    preferred_element_type=jnp.float32) + b
        return jnp.maximum(y, 0.0).astype(jnp.bfloat16)

    h = fc_relu(x, p["w1"], p["b1"])
    h = fc_relu(h, p["w2"], p["b2"])
    h = fc_relu(h, p["w3"], p["b3"])
    h = fc_relu(h, p["w4"], p["b4"])
    out = jnp.dot(h, p["w_heads"], preferred_element_type=jnp.float32) + p["b_heads"]
    out = out[:, :p["out_width"]]
    return out[:, :backcast_length], out[:, backcast_length:]


# ---------------------------------------------------------------------------
# Reference 2: unfused f32 chain in numpy, exactly mirroring the PyTorch
# forward (validates the offline fold + bf16 casts; looser tolerance).
# ---------------------------------------------------------------------------
def reference_forward_unfused_f32(x_np, raw, backcast_length):
    def fc_relu(h, w, b):
        return np.maximum(h @ w + b, 0.0)

    h = fc_relu(x_np, raw["w1"], raw["b1"])
    h = fc_relu(h, raw["w2"], raw["b2"])
    h = fc_relu(h, raw["w3"], raw["b3"])
    h = fc_relu(h, raw["w4"], raw["b4"])
    b = ((h @ raw["wb"] + raw["bb"]) @ raw["basis"]) @ raw["wdb"]
    f = ((h @ raw["wf"] + raw["bf"]) @ raw["basis"]) @ raw["wdf"]
    return b, f


if __name__ == "__main__":
    B = 2
    backcast_length = 16
    forecast_length = 8
    units = 32
    basis_dim = 32

    key = jax.random.PRNGKey(0)
    k_x, k_p = jax.random.split(key)
    x = jax.random.normal(k_x, (B, backcast_length), dtype=jnp.float32)
    params = init_params(k_p, units, backcast_length, forecast_length, basis_dim)

    back, fore = symlet3_wavelet_forward(x, params, backcast_length=backcast_length)
    back = jax.block_until_ready(back)
    fore = jax.block_until_ready(fore)

    # (1) precision-matched check against the same folded bf16 weights.
    ref_back, ref_fore = reference_forward_folded(x, params, backcast_length)
    np.testing.assert_allclose(np.asarray(back), np.asarray(ref_back),
                               rtol=1e-4, atol=1e-4)
    np.testing.assert_allclose(np.asarray(fore), np.asarray(ref_fore),
                               rtol=1e-4, atol=1e-4)

    # (2) PyTorch-faithful, unfused f32 chain (numpy) — validates the
    # basis/down-sample fold and bf16 casts end-to-end.
    raw = params["_f32_unfused"]
    f32_back, f32_fore = reference_forward_unfused_f32(np.asarray(x), raw,
                                                       backcast_length)
    np.testing.assert_allclose(np.asarray(back), f32_back, rtol=5e-2, atol=5e-2)
    np.testing.assert_allclose(np.asarray(fore), f32_fore, rtol=5e-2, atol=5e-2)

    print("KERNEL_OK")
</pallas_src>

<mosaic_0001>
module attributes {stable_mosaic.version = 11 : i64} {
  func.func @_symlet3_kernel(%arg0: i32, %arg1: memref<16x16xf32, #tpu.memory_space<vmem>>, %arg2: memref<16x32xbf16, #tpu.memory_space<vmem>>, %arg3: memref<1x32xf32, #tpu.memory_space<vmem>>, %arg4: memref<32x32xbf16, #tpu.memory_space<vmem>>, %arg5: memref<1x32xf32, #tpu.memory_space<vmem>>, %arg6: memref<32x32xbf16, #tpu.memory_space<vmem>>, %arg7: memref<1x32xf32, #tpu.memory_space<vmem>>, %arg8: memref<32x32xbf16, #tpu.memory_space<vmem>>, %arg9: memref<1x32xf32, #tpu.memory_space<vmem>>, %arg10: memref<32x128xbf16, #tpu.memory_space<vmem>>, %arg11: memref<1x128xf32, #tpu.memory_space<vmem>>, %arg12: memref<16x128xf32, #tpu.memory_space<vmem>>) attributes {dimension_semantics = [#tpu.dimension_semantics<parallel>], iteration_bounds = array<i64: 1>, scalar_prefetch = 0 : i64, scratch_operands = 0 : i64, tpu.core_type = #tpu.core_type<tc>, window_params = [{transform_indices = @transform_0, window_bounds = array<i64: 16, 16>}, {pipeline_mode = #tpu.pipeline_mode<synchronous>, transform_indices = @transform_1, window_bounds = array<i64: 16, 32>}, {pipeline_mode = #tpu.pipeline_mode<synchronous>, transform_indices = @transform_2, window_bounds = array<i64: 1, 32>}, {pipeline_mode = #tpu.pipeline_mode<synchronous>, transform_indices = @transform_3, window_bounds = array<i64: 32, 32>}, {pipeline_mode = #tpu.pipeline_mode<synchronous>, transform_indices = @transform_4, window_bounds = array<i64: 1, 32>}, {pipeline_mode = #tpu.pipeline_mode<synchronous>, transform_indices = @transform_5, window_bounds = array<i64: 32, 32>}, {pipeline_mode = #tpu.pipeline_mode<synchronous>, transform_indices = @transform_6, window_bounds = array<i64: 1, 32>}, {pipeline_mode = #tpu.pipeline_mode<synchronous>, transform_indices = @transform_7, window_bounds = array<i64: 32, 32>}, {pipeline_mode = #tpu.pipeline_mode<synchronous>, transform_indices = @transform_8, window_bounds = array<i64: 1, 32>}, {pipeline_mode = #tpu.pipeline_mode<synchronous>, transform_indices = @transform_9, window_bounds = array<i64: 32, 128>}, {pipeline_mode = #tpu.pipeline_mode<synchronous>, transform_indices = @transform_10, window_bounds = array<i64: 1, 128>}, {transform_indices = @transform_11, window_bounds = array<i64: 16, 128>}]} {
    %c0 = arith.constant 0 : index
    %c0_0 = arith.constant 0 : index
    %0 = vector.load %arg1[%c0, %c0_0] : memref<16x16xf32, #tpu.memory_space<vmem>>, vector<16x16xf32>
    %1 = arith.truncf %0 : vector<16x16xf32> to vector<16x16xbf16>
    %c0_1 = arith.constant 0 : index
    %c0_2 = arith.constant 0 : index
    %2 = vector.load %arg2[%c0_1, %c0_2] : memref<16x32xbf16, #tpu.memory_space<vmem>>, vector<16x32xbf16>
    %cst = arith.constant dense<0.000000e+00> : vector<16x32xf32>
    %3 = tpu.matmul %1, %2, %cst {dimension_numbers = #tpu.dot_dimension_numbers<[1], [0], [0], [1], [0, 0, 1, 1], [], []>} : vector<16x16xbf16>, vector<16x32xbf16>, vector<16x32xf32> -> vector<16x32xf32>
    %c0_3 = arith.constant 0 : index
    %c0_4 = arith.constant 0 : index
    %4 = vector.load %arg3[%c0_3, %c0_4] : memref<1x32xf32, #tpu.memory_space<vmem>>, vector<1x32xf32>
    %5 = vector.broadcast %4 : vector<1x32xf32> to vector<16x32xf32>
    %6 = arith.addf %3, %5 : vector<16x32xf32>
    %cst_5 = arith.constant 0.000000e+00 : f32
    %7 = vector.broadcast %cst_5 : f32 to vector<16x32xf32>
    %8 = arith.maximumf %6, %7 : vector<16x32xf32>
    %9 = arith.truncf %8 : vector<16x32xf32> to vector<16x32xbf16>
    %c0_6 = arith.constant 0 : index
    %c0_7 = arith.constant 0 : index
    %10 = vector.load %arg4[%c0_6, %c0_7] : memref<32x32xbf16, #tpu.memory_space<vmem>>, vector<32x32xbf16>
    %cst_8 = arith.constant dense<0.000000e+00> : vector<16x32xf32>
    %11 = tpu.matmul %9, %10, %cst_8 {dimension_numbers = #tpu.dot_dimension_numbers<[1], [0], [0], [1], [0, 0, 1, 1], [], []>} : vector<16x32xbf16>, vector<32x32xbf16>, vector<16x32xf32> -> vector<16x32xf32>
    %c0_9 = arith.constant 0 : index
    %c0_10 = arith.constant 0 : index
    %12 = vector.load %arg5[%c0_9, %c0_10] : memref<1x32xf32, #tpu.memory_space<vmem>>, vector<1x32xf32>
    %13 = vector.broadcast %12 : vector<1x32xf32> to vector<16x32xf32>
    %14 = arith.addf %11, %13 : vector<16x32xf32>
    %cst_11 = arith.constant 0.000000e+00 : f32
    %15 = vector.broadcast %cst_11 : f32 to vector<16x32xf32>
    %16 = arith.maximumf %14, %15 : vector<16x32xf32>
    %17 = arith.truncf %16 : vector<16x32xf32> to vector<16x32xbf16>
    %c0_12 = arith.constant 0 : index
    %c0_13 = arith.constant 0 : index
    %18 = vector.load %arg6[%c0_12, %c0_13] : memref<32x32xbf16, #tpu.memory_space<vmem>>, vector<32x32xbf16>
    %cst_14 = arith.constant dense<0.000000e+00> : vector<16x32xf32>
    %19 = tpu.matmul %17, %18, %cst_14 {dimension_numbers = #tpu.dot_dimension_numbers<[1], [0], [0], [1], [0, 0, 1, 1], [], []>} : vector<16x32xbf16>, vector<32x32xbf16>, vector<16x32xf32> -> vector<16x32xf32>
    %c0_15 = arith.constant 0 : index
    %c0_16 = arith.constant 0 : index
    %20 = vector.load %arg7[%c0_15, %c0_16] : memref<1x32xf32, #tpu.memory_space<vmem>>, vector<1x32xf32>
    %21 = vector.broadcast %20 : vector<1x32xf32> to vector<16x32xf32>
    %22 = arith.addf %19, %21 : vector<16x32xf32>
    %cst_17 = arith.constant 0.000000e+00 : f32
    %23 = vector.broadcast %cst_17 : f32 to vector<16x32xf32>
    %24 = arith.maximumf %22, %23 : vector<16x32xf32>
    %25 = arith.truncf %24 : vector<16x32xf32> to vector<16x32xbf16>
    %c0_18 = arith.constant 0 : index
    %c0_19 = arith.constant 0 : index
    %26 = vector.load %arg8[%c0_18, %c0_19] : memref<32x32xbf16, #tpu.memory_space<vmem>>, vector<32x32xbf16>
    %cst_20 = arith.constant dense<0.000000e+00> : vector<16x32xf32>
    %27 = tpu.matmul %25, %26, %cst_20 {dimension_numbers = #tpu.dot_dimension_numbers<[1], [0], [0], [1], [0, 0, 1, 1], [], []>} : vector<16x32xbf16>, vector<32x32xbf16>, vector<16x32xf32> -> vector<16x32xf32>
    %c0_21 = arith.constant 0 : index
    %c0_22 = arith.constant 0 : index
    %28 = vector.load %arg9[%c0_21, %c0_22] : memref<1x32xf32, #tpu.memory_space<vmem>>, vector<1x32xf32>
    %29 = vector.broadcast %28 : vector<1x32xf32> to vector<16x32xf32>
    %30 = arith.addf %27, %29 : vector<16x32xf32>
    %cst_23 = arith.constant 0.000000e+00 : f32
    %31 = vector.broadcast %cst_23 : f32 to vector<16x32xf32>
    %32 = arith.maximumf %30, %31 : vector<16x32xf32>
    %33 = arith.truncf %32 : vector<16x32xf32> to vector<16x32xbf16>
    %c0_24 = arith.constant 0 : index
    %c0_25 = arith.constant 0 : index
    %34 = vector.load %arg10[%c0_24, %c0_25] : memref<32x128xbf16, #tpu.memory_space<vmem>>, vector<32x128xbf16>
    %cst_26 = arith.constant dense<0.000000e+00> : vector<16x128xf32>
    %35 = tpu.matmul %33, %34, %cst_26 {dimension_numbers = #tpu.dot_dimension_numbers<[1], [0], [0], [1], [0, 0, 1, 1], [], []>} : vector<16x32xbf16>, vector<32x128xbf16>, vector<16x128xf32> -> vector<16x128xf32>
    %c0_27 = arith.constant 0 : index
    %c0_28 = arith.constant 0 : index
    %36 = vector.load %arg11[%c0_27, %c0_28] : memref<1x128xf32, #tpu.memory_space<vmem>>, vector<1x128xf32>
    %37 = vector.broadcast %36 : vector<1x128xf32> to vector<16x128xf32>
    %38 = arith.addf %35, %37 : vector<16x128xf32>
    %c0_29 = arith.constant 0 : index
    %c0_30 = arith.constant 0 : index
    %39 = vector.load %arg12[%c0_29, %c0_30] : memref<16x128xf32, #tpu.memory_space<vmem>>, vector<16x128xf32>
    tpu.vector_store %arg12[%c0_29, %c0_30], %38 {strides = array<i32>} : memref<16x128xf32, #tpu.memory_space<vmem>>, vector<16x128xf32>,
    return
  }
  func.func @transform_0(%arg0: i32) -> (i32, i32) {
    %c0_i32 = arith.constant 0 : i32
    %c0_i32_0 = arith.constant 0 : i32
    return %arg0, %c0_i32 : i32, i32
  }
  func.func @transform_1(%arg0: i32) -> (i32, i32) {
    %c0_i32 = arith.constant 0 : i32
    %c0_i32_0 = arith.constant 0 : i32
    %c0_i32_1 = arith.constant 0 : i32
    return %c0_i32, %c0_i32_0 : i32, i32
  }
  func.func @transform_2(%arg0: i32) -> (i32, i32) {
    %c0_i32 = arith.constant 0 : i32
    %c0_i32_0 = arith.constant 0 : i32
    %c0_i32_1 = arith.constant 0 : i32
    return %c0_i32, %c0_i32_0 : i32, i32
  }
  func.func @transform_3(%arg0: i32) -> (i32, i32) {
    %c0_i32 = arith.constant 0 : i32
    %c0_i32_0 = arith.constant 0 : i32
    %c0_i32_1 = arith.constant 0 : i32
    return %c0_i32, %c0_i32_0 : i32, i32
  }
  func.func @transform_4(%arg0: i32) -> (i32, i32) {
    %c0_i32 = arith.constant 0 : i32
    %c0_i32_0 = arith.constant 0 : i32
    %c0_i32_1 = arith.constant 0 : i32
    return %c0_i32, %c0_i32_0 : i32, i32
  }
  func.func @transform_5(%arg0: i32) -> (i32, i32) {
    %c0_i32 = arith.constant 0 : i32
    %c0_i32_0 = arith.constant 0 : i32
    %c0_i32_1 = arith.constant 0 : i32
    return %c0_i32, %c0_i32_0 : i32, i32
  }
  func.func @transform_6(%arg0: i32) -> (i32, i32) {
    %c0_i32 = arith.constant 0 : i32
    %c0_i32_0 = arith.constant 0 : i32
    %c0_i32_1 = arith.constant 0 : i32
    return %c0_i32, %c0_i32_0 : i32, i32
  }
  func.func @transform_7(%arg0: i32) -> (i32, i32) {
    %c0_i32 = arith.constant 0 : i32
    %c0_i32_0 = arith.constant 0 : i32
    %c0_i32_1 = arith.constant 0 : i32
    return %c0_i32, %c0_i32_0 : i32, i32
  }
  func.func @transform_8(%arg0: i32) -> (i32, i32) {
    %c0_i32 = arith.constant 0 : i32
    %c0_i32_0 = arith.constant 0 : i32
    %c0_i32_1 = arith.constant 0 : i32
    return %c0_i32, %c0_i32_0 : i32, i32
  }
  func.func @transform_9(%arg0: i32) -> (i32, i32) {
    %c0_i32 = arith.constant 0 : i32
    %c0_i32_0 = arith.constant 0 : i32
    %c0_i32_1 = arith.constant 0 : i32
    return %c0_i32, %c0_i32_0 : i32, i32
  }
  func.func @transform_10(%arg0: i32) -> (i32, i32) {
    %c0_i32 = arith.constant 0 : i32
    %c0_i32_0 = arith.constant 0 : i32
    %c0_i32_1 = arith.constant 0 : i32
    return %c0_i32, %c0_i32_0 : i32, i32
  }
  func.func @transform_11(%arg0: i32) -> (i32, i32) {
    %c0_i32 = arith.constant 0 : i32
    %c0_i32_0 = arith.constant 0 : i32
    return %arg0, %c0_i32 : i32, i32
  }
}

</mosaic_0001>

<llo_original>
// kernel: tpu_custom_call.1
$region0: #{tpu_custom_call.1}
  #allocation0 [shape = 'u32[]', space=smem, size = 0x4, offset = 0x4, fixed_abs, tag = 'smem constant byte address 0x4 - core index']
  #allocation1 [shape = 'u32[144,128]{1,0:T(1,128)}', space=vmem, size = 0x12000, scoped, tag = 'internal scratch']
  %s0 = inlined_call_operand.hbm [shape: f32[16,16], index: 0, kind: input, shape index: {}]
  %s1 = inlined_call_operand.hbm [shape: bf16[16,32], index: 1, kind: input, shape index: {}]
  %s2 = inlined_call_operand.hbm [shape: f32[1,32], index: 2, kind: input, shape index: {}]
  %s3 = inlined_call_operand.hbm [shape: bf16[32,32], index: 3, kind: input, shape index: {}]
  %s4 = inlined_call_operand.hbm [shape: f32[1,32], index: 4, kind: input, shape index: {}]
  %s5 = inlined_call_operand.hbm [shape: bf16[32,32], index: 5, kind: input, shape index: {}]
  %s6 = inlined_call_operand.hbm [shape: f32[1,32], index: 6, kind: input, shape index: {}]
  %s7 = inlined_call_operand.hbm [shape: bf16[32,32], index: 7, kind: input, shape index: {}]
  %s8 = inlined_call_operand.hbm [shape: f32[1,32], index: 8, kind: input, shape index: {}]
  %s9 = inlined_call_operand.vmem [shape: bf16[32,128], index: 9, kind: input, shape index: {}]
  %s10 = inlined_call_operand.vmem [shape: f32[1,128], index: 10, kind: input, shape index: {}]
  %s11 = inlined_call_operand.hbm [shape: f32[16,128], index: 11, kind: output, shape index: {}]
  %s12 = sld [smem:[#allocation0]]
  $region90: #{tpu_custom_call.1} parent=0
    _
  %s14 = ssub.s32 1, %s12
  %s15 = scalar_select 0, %s14, %s12
  $region1: #{tpu_custom_call.1} parent=0
    #allocation2 [shape = 'u8[8192]{0}', space=vmem, size = 0x2000, scoped, tag = 'input window, operand 0, single buffered']
    #allocation3 [shape = 's32[1]{0}', space=sflag, size = 0x4, scoped, tag = 'scoped memory for tpu_custom_call.1']
    #allocation4 [shape = 's32[1]{0}', space=sflag, size = 0x4, scoped, tag = 'scoped memory for tpu_custom_call.1']
    #allocation5 [shape = 'u8[4096]{0}', space=vmem, size = 0x1000, scoped, tag = 'input window, operand 1, single buffered']
    #allocation6 [shape = 's32[1]{0}', space=sflag, size = 0x4, scoped, tag = 'scoped memory for tpu_custom_call.1']
    #allocation7 [shape = 'u8[512]{0}', space=vmem, size = 0x400, scoped, tag = 'input window, operand 2, single buffered']
    #allocation8 [shape = 'u8[8192]{0}', space=vmem, size = 0x2000, scoped, tag = 'input window, operand 3, single buffered']
    #allocation9 [shape = 's32[1]{0}', space=sflag, size = 0x4, scoped, tag = 'scoped memory for tpu_custom_call.1']
    #allocation10 [shape = 'u8[512]{0}', space=vmem, size = 0x400, scoped, tag = 'input window, operand 4, single buffered']
    #allocation11 [shape = 'u8[8192]{0}', space=vmem, size = 0x2000, scoped, tag = 'input window, operand 5, single buffered']
    #allocation12 [shape = 's32[1]{0}', space=sflag, size = 0x4, scoped, tag = 'scoped memory for tpu_custom_call.1']
    #allocation13 [shape = 'u8[512]{0}', space=vmem, size = 0x400, scoped, tag = 'input window, operand 6, single buffered']
    #allocation14 [shape = 'u8[8192]{0}', space=vmem, size = 0x2000, scoped, tag = 'input window, operand 7, single buffered']
    #allocation15 [shape = 's32[1]{0}', space=sflag, size = 0x4, scoped, tag = 'scoped memory for tpu_custom_call.1']
    #allocation16 [shape = 'u8[512]{0}', space=vmem, size = 0x400, scoped, tag = 'input window, operand 8, single buffered']
    #allocation17 [shape = 'u8[8192]{0}', space=vmem, size = 0x2000, scoped, tag = 'output window, operand 0, single buffered']
    %16 = vsyncpa [#allocation3], 0
    %17 = vsyncpa [#allocation6], 0
    %18 = vsyncpa [#allocation9], 0
    %19 = vsyncpa [#allocation12], 0
    %20 = vsyncpa [#allocation15], 0
    %21 = vsyncpa [#allocation4], 0
    // Predicated region
    $region2: #{tpu_custom_call.1} parent=1 // pred_check
      _
    $region3: #{tpu_custom_call.1} parent=1 // pred_check_branch
      %23 = sbr.rel (0) target = $region5
    $region4: #{tpu_custom_call.1} parent=1 // pred_region
      %s25 = ssub.s32 256, 256
      %26 = vsyncadd [#allocation3], %s25
      %s27 = sshll.u32 [#allocation2], 4
      %s28 = int_to_ptr.vmem [resolvable:$true] %s27
      %33 = dma.hbm_to_vmem [thread:$0]  %s0, 256, %s28, [#allocation3], 128, 128, 8
    $region5: #{tpu_custom_call.1} parent=1 // pred_fallthru
      _
    // Predicated region
    $region6: #{tpu_custom_call.1} parent=1 // pred_check
      _
    $region7: #{tpu_custom_call.1} parent=1 // pred_check_branch
      %35 = sbr.rel (0) target = $region9
    $region8: #{tpu_custom_call.1} parent=1 // pred_region
      %s37 = ssub.s32 128, 128
      %38 = vsyncadd [#allocation6], %s37
      %s39 = sshll.u32 [#allocation5], 4
      %s40 = int_to_ptr.vmem [resolvable:$true] %s39
      %45 = dma.hbm_to_vmem [thread:$0]  %s1, 128, %s40, [#allocation6], 64, 64, 4
    $region9: #{tpu_custom_call.1} parent=1 // pred_fallthru
      _
    // Predicated region
    $region10: #{tpu_custom_call.1} parent=1 // pred_check
      _
    $region11: #{tpu_custom_call.1} parent=1 // pred_check_branch
      %47 = sbr.rel (0) target = $region13
    $region12: #{tpu_custom_call.1} parent=1 // pred_region
      %s49 = ssub.s32 16, 16
      %50 = vsyncadd [#allocation6], %s49
      %s52 = sshll.u32 [#allocation7], 4
      %s53 = int_to_ptr.vmem [resolvable:$true] %s52
      %55 = dma.hbm_to_vmem [thread:$0]  %s2, 16, %s53, [#allocation6]
    $region13: #{tpu_custom_call.1} parent=1 // pred_fallthru
      _
    // Predicated region
    $region14: #{tpu_custom_call.1} parent=1 // pred_check
      _
    $region15: #{tpu_custom_call.1} parent=1 // pred_check_branch
      %57 = sbr.rel (0) target = $region17
    $region16: #{tpu_custom_call.1} parent=1 // pred_region
      %s59 = ssub.s32 256, 256
      %60 = vsyncadd [#allocation9], %s59
      %s61 = sshll.u32 [#allocation8], 4
      %s62 = int_to_ptr.vmem [resolvable:$true] %s61
      %67 = dma.hbm_to_vmem [thread:$0]  %s3, 256, %s62, [#allocation9], 64, 64, 4
    $region17: #{tpu_custom_call.1} parent=1 // pred_fallthru
      _
    // Predicated region
    $region18: #{tpu_custom_call.1} parent=1 // pred_check
      _
    $region19: #{tpu_custom_call.1} parent=1 // pred_check_branch
      %69 = sbr.rel (0) target = $region21
    $region20: #{tpu_custom_call.1} parent=1 // pred_region
      %s71 = ssub.s32 16, 16
      %72 = vsyncadd [#allocation9], %s71
      %s74 = sshll.u32 [#allocation10], 4
      %s75 = int_to_ptr.vmem [resolvable:$true] %s74
      %77 = dma.hbm_to_vmem [thread:$0]  %s4, 16, %s75, [#allocation9]
    $region21: #{tpu_custom_call.1} parent=1 // pred_fallthru
      _
    // Predicated region
    $region22: #{tpu_custom_call.1} parent=1 // pred_check
      _
    $region23: #{tpu_custom_call.1} parent=1 // pred_check_branch
      %79 = sbr.rel (0) target = $region25
    $region24: #{tpu_custom_call.1} parent=1 // pred_region
      %s81 = ssub.s32 256, 256
      %82 = vsyncadd [#allocation12], %s81
      %s83 = sshll.u32 [#allocation11], 4
      %s84 = int_to_ptr.vmem [resolvable:$true] %s83
      %89 = dma.hbm_to_vmem [thread:$0]  %s5, 256, %s84, [#allocation12], 64, 64, 4
    $region25: #{tpu_custom_call.1} parent=1 // pred_fallthru
      _
    // Predicated region
    $region26: #{tpu_custom_call.1} parent=1 // pred_check
      _
    $region27: #{tpu_custom_call.1} parent=1 // pred_check_branch
      %91 = sbr.rel (0) target = $region29
    $region28: #{tpu_custom_call.1} parent=1 // pred_region
      %s93 = ssub.s32 16, 16
      %94 = vsyncadd [#allocation12], %s93
      %s96 = sshll.u32 [#allocation13], 4
      %s97 = int_to_ptr.vmem [resolvable:$true] %s96
      %99 = dma.hbm_to_vmem [thread:$0]  %s6, 16, %s97, [#allocation12]
    $region29: #{tpu_custom_call.1} parent=1 // pred_fallthru
      _
    // Predicated region
    $region30: #{tpu_custom_call.1} parent=1 // pred_check
      _
    $region31: #{tpu_custom_call.1} parent=1 // pred_check_branch
      %101 = sbr.rel (0) target = $region33
    $region32: #{tpu_custom_call.1} parent=1 // pred_region
      %s103 = ssub.s32 256, 256
      %104 = vsyncadd [#allocation15], %s103
      %s105 = sshll.u32 [#allocation14], 4
      %s106 = int_to_ptr.vmem [resolvable:$true] %s105
      %111 = dma.hbm_to_vmem [thread:$0]  %s7, 256, %s106, [#allocation15], 64, 64, 4
    $region33: #{tpu_custom_call.1} parent=1 // pred_fallthru
      _
    // Predicated region
    $region34: #{tpu_custom_call.1} parent=1 // pred_check
      _
    $region35: #{tpu_custom_call.1} parent=1 // pred_check_branch
      %113 = sbr.rel (0) target = $region37
    $region36: #{tpu_custom_call.1} parent=1 // pred_region
      %s115 = ssub.s32 16, 16
      %116 = vsyncadd [#allocation15], %s115
      %s118 = sshll.u32 [#allocation16], 4
      %s119 = int_to_ptr.vmem [resolvable:$true] %s118
      %121 = dma.hbm_to_vmem [thread:$0]  %s8, 16, %s119, [#allocation15]
    $region37: #{tpu_custom_call.1} parent=1 // pred_fallthru
      _
    // Predicated region
    $region38: #{tpu_custom_call.1} parent=1 // pred_check
      _
    $region39: #{tpu_custom_call.1} parent=1 // pred_check_branch
      %123 = sbr.rel (0) target = $region41
    $region40: #{tpu_custom_call.1} parent=1 // pred_region
      _
    $region41: #{tpu_custom_call.1} parent=1 // pred_fallthru
      _
    // Predicated region
    $region42: #{tpu_custom_call.1} parent=1 // pred_check
      _
    $region43: #{tpu_custom_call.1} parent=1 // pred_check_branch
      %125 = sbr.rel (0) target = $region45
    $region44: #{tpu_custom_call.1} parent=1 // pred_region
      _
    $region45: #{tpu_custom_call.1} parent=1 // pred_fallthru
      _
    // Predicated region
    $region46: #{tpu_custom_call.1} parent=1 // pred_check
      _
    $region47: #{tpu_custom_call.1} parent=1 // pred_check_branch
      %127 = sbr.rel (0) target = $region49
    $region48: #{tpu_custom_call.1} parent=1 // pred_region
      %128 = dma.done [#allocation3], 256
    $region49: #{tpu_custom_call.1} parent=1 // pred_fallthru
      _
    // Predicated region
    $region50: #{tpu_custom_call.1} parent=1 // pred_check
      _
    $region51: #{tpu_custom_call.1} parent=1 // pred_check_branch
      %130 = sbr.rel (0) target = $region53
    $region52: #{tpu_custom_call.1} parent=1 // pred_region
      %131 = dma.done [#allocation6], 128
    $region53: #{tpu_custom_call.1} parent=1 // pred_fallthru
      _
    // Predicated region
    $region54: #{tpu_custom_call.1} parent=1 // pred_check
      _
    $region55: #{tpu_custom_call.1} parent=1 // pred_check_branch
      %133 = sbr.rel (0) target = $region57
    $region56: #{tpu_custom_call.1} parent=1 // pred_region
      %134 = dma.done [#allocation6], 16
    $region57: #{tpu_custom_call.1} parent=1 // pred_fallthru
      _
    // Predicated region
    $region58: #{tpu_custom_call.1} parent=1 // pred_check
      _
    $region59: #{tpu_custom_call.1} parent=1 // pred_check_branch
      %136 = sbr.rel (0) target = $region61
    $region60: #{tpu_custom_call.1} parent=1 // pred_region
      %137 = dma.done [#allocation9], 256
    $region61: #{tpu_custom_call.1} parent=1 // pred_fallthru
      _
    // Predicated region
    $region62: #{tpu_custom_call.1} parent=1 // pred_check
      _
    $region63: #{tpu_custom_call.1} parent=1 // pred_check_branch
      %139 = sbr.rel (0) target = $region65
    $region64: #{tpu_custom_call.1} parent=1 // pred_region
      %140 = dma.done [#allocation9], 16
    $region65: #{tpu_custom_call.1} parent=1 // pred_fallthru
      _
    // Predicated region
    $region66: #{tpu_custom_call.1} parent=1 // pred_check
      _
    $region67: #{tpu_custom_call.1} parent=1 // pred_check_branch
      %142 = sbr.rel (0) target = $region69
    $region68: #{tpu_custom_call.1} parent=1 // pred_region
      %143 = dma.done [#allocation12], 256
    $region69: #{tpu_custom_call.1} parent=1 // pred_fallthru
      _
    // Predicated region
    $region70: #{tpu_custom_call.1} parent=1 // pred_check
      _
    $region71: #{tpu_custom_call.1} parent=1 // pred_check_branch
      %145 = sbr.rel (0) target = $region73
    $region72: #{tpu_custom_call.1} parent=1 // pred_region
      %146 = dma.done [#allocation12], 16
    $region73: #{tpu_custom_call.1} parent=1 // pred_fallthru
      _
    // Predicated region
    $region74: #{tpu_custom_call.1} parent=1 // pred_check
      _
    $region75: #{tpu_custom_call.1} parent=1 // pred_check_branch
      %148 = sbr.rel (0) target = $region77
    $region76: #{tpu_custom_call.1} parent=1 // pred_region
      %149 = dma.done [#allocation15], 256
    $region77: #{tpu_custom_call.1} parent=1 // pred_fallthru
      _
    // Predicated region
    $region78: #{tpu_custom_call.1} parent=1 // pred_check
      _
    $region79: #{tpu_custom_call.1} parent=1 // pred_check_branch
      %151 = sbr.rel (0) target = $region81
    $region80: #{tpu_custom_call.1} parent=1 // pred_region
      %152 = dma.done [#allocation15], 16
    $region81: #{tpu_custom_call.1} parent=1 // pred_fallthru
      _
    %v154 = vld [vmem:[#allocation2] sm:$0xff]
    %v155 = vld [vmem:[#allocation2 + $0x8] sm:$0xff]
    %v156 = vpack.c.bf16 %v155, %v154
    %v157 = vld [vmem:[#allocation5] sm:$0xf]
    %v158 = vld [vmem:[#allocation5 + $0x4] sm:$0xf]
    %v159 = vld [vmem:[#allocation7] sm:$0x1]
    %v161 = vlaneseq
    %v162 = vshrl.u32 %v161, 7
    %v163 = vsub.s32 0, %v162
    %v164 = vrot.slane %v159, %v163
    %v168 = vunpack.c.l.b16 %v157
    %v169 = vunpack.c.l.b16 %v158
    %v170 = vpack.c.b16 %v169, %v168
    %vm172 = vcmask 130048
    %v174 = vsel %vm172, %v156, 0
    %176 = vmatprep.subr.bf16.mxu0 0
    %177 = vmatpush1.bf16.msra.mxu0 0
    %178 = vmatprep.subr.bf16.mxu0 0
    %179 = vmatpush1.bf16.msra.mxu0 0
    %180 = vmatprep.subr.bf16.mxu0 0
    %181 = vmatpush1.bf16.msra.mxu0 0
    %182 = vmatprep.subr.bf16.mxu0 0
    %183 = vmatpush1.bf16.msra.mxu0 0
    %184 = vmatprep.subr.bf16.mxu0 0
    %185 = vmatpush1.bf16.msra.mxu0 0
    %186 = vmatprep.subr.bf16.mxu0 0
    %187 = vmatpush1.bf16.msra.mxu0 0
    %188 = vmatprep.subr.bf16.mxu0 0
    %189 = vmatpush1.bf16.msra.mxu0 0
    %190 = vmatprep.subr.bf16.mxu0 0
    %191 = vmatpush1.bf16.msra.mxu0 %v170
    %192 = vmatprep.subr.bf16.mxu0 0
    %193 = vmatpush2.bf16.msra.mxu0 0
    %194 = vmatprep.subr.bf16.mxu0 0
    %195 = vmatpush2.bf16.msra.mxu0 0
    %196 = vmatprep.subr.bf16.mxu0 0
    %197 = vmatpush2.bf16.msra.mxu0 0
    %198 = vmatprep.subr.bf16.mxu0 0
    %199 = vmatpush2.bf16.msra.mxu0 0
    %200 = vmatprep.subr.bf16.mxu0 0
    %201 = vmatpush2.bf16.msra.mxu0 0
    %202 = vmatprep.subr.bf16.mxu0 0
    %203 = vmatpush2.bf16.msra.mxu0 0
    %204 = vmatprep.subr.bf16.mxu0 0
    %205 = vmatpush2.bf16.msra.mxu0 0
    %206 = vmatprep.subr.bf16.mxu0 0
    %207 = vmatpush2.bf16.msra.mxu0 0
    %208 = vmatprep.mubr.bf16.mxu0 0
    %209 = vmatmul.mubr.bf16.gmra.mxu0 %v174
    %v210 = vpop.f32.mrf.mxu0
    %v211 = vadd.f32 %v164, %v210
    %v212 = vpop.f32.mrf.mxu0
    %v213 = vpop.f32.mrf.mxu0
    %v214 = vadd.f32 %v164, %v213
    %v215 = vpop.f32.mrf.mxu0
    %216 = vdwg.mxu0
    %v217 = vmax.f32 %v211, 0.0
    %v218 = vmax.f32 %v214, 0.0
    %v219 = vpack.c.bf16 %v218, %v217
    %v220 = vld [vmem:[#allocation8] sm:$0xf]
    %v221 = vld [vmem:[#allocation8 + $0x4] sm:$0xf]
    %v222 = vld [vmem:[#allocation8 + $0x8] sm:$0xf]
    %v223 = vld [vmem:[#allocation8 + $0xc] sm:$0xf]
    %v224 = vld [vmem:[#allocation10] sm:$0x1]
    %v226 = vlaneseq
    %v227 = vshrl.u32 %v226, 7
    %v228 = vsub.s32 0, %v227
    %v229 = vrot.slane %v224, %v228
    %v235 = vunpack.c.l.b16 %v220
    %v236 = vunpack.c.l.b16 %v221
    %v237 = vunpack.c.l.b16 %v222
    %v238 = vunpack.c.l.b16 %v223
    %v239 = vpack.c.b16 %v236, %v235
    %v240 = vpack.c.b16 %v238, %v237
    %vm243 = vcmask 261120
    %v245 = vsel %vm243, %v219, 0
    %247 = vmatprep.subr.bf16.mxu0 0
    %248 = vmatpush1.bf16.msra.mxu0 0
    %249 = vmatprep.subr.bf16.mxu0 0
    %250 = vmatpush1.bf16.msra.mxu0 0
    %251 = vmatprep.subr.bf16.mxu0 0
    %252 = vmatpush1.bf16.msra.mxu0 0
    %253 = vmatprep.subr.bf16.mxu0 0
    %254 = vmatpush1.bf16.msra.mxu0 0
    %255 = vmatprep.subr.bf16.mxu0 0
    %256 = vmatpush1.bf16.msra.mxu0 0
    %257 = vmatprep.subr.bf16.mxu0 0
    %258 = vmatpush1.bf16.msra.mxu0 0
    %259 = vmatprep.subr.bf16.mxu0 0
    %260 = vmatpush1.bf16.msra.mxu0 %v240
    %261 = vmatprep.subr.bf16.mxu0 0
    %262 = vmatpush1.bf16.msra.mxu0 %v239
    %263 = vmatprep.subr.bf16.mxu0 0
    %264 = vmatpush2.bf16.msra.mxu0 0
    %265 = vmatprep.subr.bf16.mxu0 0
    %266 = vmatpush2.bf16.msra.mxu0 0
    %267 = vmatprep.subr.bf16.mxu0 0
    %268 = vmatpush2.bf16.msra.mxu0 0
    %269 = vmatprep.subr.bf16.mxu0 0
    %270 = vmatpush2.bf16.msra.mxu0 0
    %271 = vmatprep.subr.bf16.mxu0 0
    %272 = vmatpush2.bf16.msra.mxu0 0
    %273 = vmatprep.subr.bf16.mxu0 0
    %274 = vmatpush2.bf16.msra.mxu0 0
    %275 = vmatprep.subr.bf16.mxu0 0
    %276 = vmatpush2.bf16.msra.mxu0 0
    %277 = vmatprep.subr.bf16.mxu0 0
    %278 = vmatpush2.bf16.msra.mxu0 0
    %279 = vmatprep.mubr.bf16.mxu0 0
    %280 = vmatmul.mubr.bf16.gmra.mxu0 %v245
    %v281 = vpop.f32.mrf.mxu0
    %v282 = vadd.f32 %v229, %v281
    %v283 = vpop.f32.mrf.mxu0
    %v284 = vpop.f32.mrf.mxu0
    %v285 = vadd.f32 %v229, %v284
    %v286 = vpop.f32.mrf.mxu0
    %287 = vdwg.mxu0
    %v288 = vmax.f32 %v282, 0.0
    %v289 = vmax.f32 %v285, 0.0
    %v290 = vpack.c.bf16 %v289, %v288
    %v291 = vld [vmem:[#allocation11] sm:$0xf]
    %v292 = vld [vmem:[#allocation11 + $0x4] sm:$0xf]
    %v293 = vld [vmem:[#allocation11 + $0x8] sm:$0xf]
    %v294 = vld [vmem:[#allocation11 + $0xc] sm:$0xf]
    %v295 = vld [vmem:[#allocation13] sm:$0x1]
    %v297 = vlaneseq
    %v298 = vshrl.u32 %v297, 7
    %v299 = vsub.s32 0, %v298
    %v300 = vrot.slane %v295, %v299
    %v306 = vunpack.c.l.b16 %v291
    %v307 = vunpack.c.l.b16 %v292
    %v308 = vunpack.c.l.b16 %v293
    %v309 = vunpack.c.l.b16 %v294
    %v310 = vpack.c.b16 %v307, %v306
    %v311 = vpack.c.b16 %v309, %v308
    %v315 = vsel %vm243, %v290, 0
    %317 = vmatprep.subr.bf16.mxu0 0
    %318 = vmatpush1.bf16.msra.mxu0 0
    %319 = vmatprep.subr.bf16.mxu0 0
    %320 = vmatpush1.bf16.msra.mxu0 0
    %321 = vmatprep.subr.bf16.mxu0 0
    %322 = vmatpush1.bf16.msra.mxu0 0
    %323 = vmatprep.subr.bf16.mxu0 0
    %324 = vmatpush1.bf16.msra.mxu0 0
    %325 = vmatprep.subr.bf16.mxu0 0
    %326 = vmatpush1.bf16.msra.mxu0 0
    %327 = vmatprep.subr.bf16.mxu0 0
    %328 = vmatpush1.bf16.msra.mxu0 0
    %329 = vmatprep.subr.bf16.mxu0 0
    %330 = vmatpush1.bf16.msra.mxu0 %v311
    %331 = vmatprep.subr.bf16.mxu0 0
    %332 = vmatpush1.bf16.msra.mxu0 %v310
    %333 = vmatprep.subr.bf16.mxu0 0
    %334 = vmatpush2.bf16.msra.mxu0 0
    %335 = vmatprep.subr.bf16.mxu0 0
    %336 = vmatpush2.bf16.msra.mxu0 0
    %337 = vmatprep.subr.bf16.mxu0 0
    %338 = vmatpush2.bf16.msra.mxu0 0
    %339 = vmatprep.subr.bf16.mxu0 0
    %340 = vmatpush2.bf16.msra.mxu0 0
    %341 = vmatprep.subr.bf16.mxu0 0
    %342 = vmatpush2.bf16.msra.mxu0 0
    %343 = vmatprep.subr.bf16.mxu0 0
    %344 = vmatpush2.bf16.msra.mxu0 0
    %345 = vmatprep.subr.bf16.mxu0 0
    %346 = vmatpush2.bf16.msra.mxu0 0
    %347 = vmatprep.subr.bf16.mxu0 0
    %348 = vmatpush2.bf16.msra.mxu0 0
    %349 = vmatprep.mubr.bf16.mxu0 0
    %350 = vmatmul.mubr.bf16.gmra.mxu0 %v315
    %v351 = vpop.f32.mrf.mxu0
    %v352 = vadd.f32 %v300, %v351
    %v353 = vpop.f32.mrf.mxu0
    %v354 = vpop.f32.mrf.mxu0
    %v355 = vadd.f32 %v300, %v354
    %v356 = vpop.f32.mrf.mxu0
    %357 = vdwg.mxu0
    %v358 = vmax.f32 %v352, 0.0
    %v359 = vmax.f32 %v355, 0.0
    %v360 = vpack.c.bf16 %v359, %v358
    %v361 = vld [vmem:[#allocation14] sm:$0xf]
    %v362 = vld [vmem:[#allocation14 + $0x4] sm:$0xf]
    %v363 = vld [vmem:[#allocation14 + $0x8] sm:$0xf]
    %v364 = vld [vmem:[#allocation14 + $0xc] sm:$0xf]
    %v365 = vld [vmem:[#allocation16] sm:$0x1]
    %v367 = vlaneseq
    %v368 = vshrl.u32 %v367, 7
    %v369 = vsub.s32 0, %v368
    %v370 = vrot.slane %v365, %v369
    %v376 = vunpack.c.l.b16 %v361
    %v377 = vunpack.c.l.b16 %v362
    %v378 = vunpack.c.l.b16 %v363
    %v379 = vunpack.c.l.b16 %v364
    %v380 = vpack.c.b16 %v377, %v376
    %v381 = vpack.c.b16 %v379, %v378
    %v385 = vsel %vm243, %v360, 0
    %387 = vmatprep.subr.bf16.mxu0 0
    %388 = vmatpush1.bf16.msra.mxu0 0
    %389 = vmatprep.subr.bf16.mxu0 0
    %390 = vmatpush1.bf16.msra.mxu0 0
    %391 = vmatprep.subr.bf16.mxu0 0
    %392 = vmatpush1.bf16.msra.mxu0 0
    %393 = vmatprep.subr.bf16.mxu0 0
    %394 = vmatpush1.bf16.msra.mxu0 0
    %395 = vmatprep.subr.bf16.mxu0 0
    %396 = vmatpush1.bf16.msra.mxu0 0
    %397 = vmatprep.subr.bf16.mxu0 0
    %398 = vmatpush1.bf16.msra.mxu0 0
    %399 = vmatprep.subr.bf16.mxu0 0
    %400 = vmatpush1.bf16.msra.mxu0 %v381
    %401 = vmatprep.subr.bf16.mxu0 0
    %402 = vmatpush1.bf16.msra.mxu0 %v380
    %403 = vmatprep.subr.bf16.mxu0 0
    %404 = vmatpush2.bf16.msra.mxu0 0
    %405 = vmatprep.subr.bf16.mxu0 0
    %406 = vmatpush2.bf16.msra.mxu0 0
    %407 = vmatprep.subr.bf16.mxu0 0
    %408 = vmatpush2.bf16.msra.mxu0 0
    %409 = vmatprep.subr.bf16.mxu0 0
    %410 = vmatpush2.bf16.msra.mxu0 0
    %411 = vmatprep.subr.bf16.mxu0 0
    %412 = vmatpush2.bf16.msra.mxu0 0
    %413 = vmatprep.subr.bf16.mxu0 0
    %414 = vmatpush2.bf16.msra.mxu0 0
    %415 = vmatprep.subr.bf16.mxu0 0
    %416 = vmatpush2.bf16.msra.mxu0 0
    %417 = vmatprep.subr.bf16.mxu0 0
    %418 = vmatpush2.bf16.msra.mxu0 0
    %419 = vmatprep.mubr.bf16.mxu0 0
    %420 = vmatmul.mubr.bf16.gmra.mxu0 %v385
    %v421 = vpop.f32.mrf.mxu0
    %v422 = vadd.f32 %v370, %v421
    %v423 = vpop.f32.mrf.mxu0
    %v424 = vpop.f32.mrf.mxu0
    %v425 = vadd.f32 %v370, %v424
    %v426 = vpop.f32.mrf.mxu0
    %427 = vdwg.mxu0
    %v428 = vmax.f32 %v422, 0.0
    %v429 = vmax.f32 %v425, 0.0
    %v430 = vpack.c.bf16 %v429, %v428
    %v431 = vld [vmem:[%s9] sm:$0xf]
    %v432 = vld [vmem:[%s9 + $0x4] sm:$0xf]
    %v433 = vld [vmem:[%s9 + $0x8] sm:$0xf]
    %v434 = vld [vmem:[%s9 + $0xc] sm:$0xf]
    %v435 = vld [vmem:[%s10] sm:$0x1]
    %v437 = vlaneseq
    %v438 = vshrl.u32 %v437, 7
    %v439 = vsub.s32 0, %v438
    %v440 = vrot.slane %v435, %v439
    %v446 = vunpack.c.l.b16 %v431
    %v447 = vunpack.c.l.b16 %v432
    %v448 = vunpack.c.l.b16 %v433
    %v449 = vunpack.c.l.b16 %v434
    %v450 = vpack.c.b16 %v447, %v446
    %v451 = vpack.c.b16 %v449, %v448
    %v455 = vsel %vm243, %v430, 0
    %457 = vmatprep.subr.bf16.mxu0 0
    %458 = vmatpush1.bf16.msra.mxu0 0
    %459 = vmatprep.subr.bf16.mxu0 0
    %460 = vmatpush1.bf16.msra.mxu0 0
    %461 = vmatprep.subr.bf16.mxu0 0
    %462 = vmatpush1.bf16.msra.mxu0 0
    %463 = vmatprep.subr.bf16.mxu0 0
    %464 = vmatpush1.bf16.msra.mxu0 0
    %465 = vmatprep.subr.bf16.mxu0 0
    %466 = vmatpush1.bf16.msra.mxu0 0
    %467 = vmatprep.subr.bf16.mxu0 0
    %468 = vmatpush1.bf16.msra.mxu0 0
    %469 = vmatprep.subr.bf16.mxu0 0
    %470 = vmatpush1.bf16.msra.mxu0 %v451
    %471 = vmatprep.subr.bf16.mxu0 0
    %472 = vmatpush1.bf16.msra.mxu0 %v450
    %473 = vmatprep.subr.bf16.mxu0 0
    %474 = vmatpush2.bf16.msra.mxu0 0
    %475 = vmatprep.subr.bf16.mxu0 0
    %476 = vmatpush2.bf16.msra.mxu0 0
    %477 = vmatprep.subr.bf16.mxu0 0
    %478 = vmatpush2.bf16.msra.mxu0 0
    %479 = vmatprep.subr.bf16.mxu0 0
    %480 = vmatpush2.bf16.msra.mxu0 0
    %481 = vmatprep.subr.bf16.mxu0 0
    %482 = vmatpush2.bf16.msra.mxu0 0
    %483 = vmatprep.subr.bf16.mxu0 0
    %484 = vmatpush2.bf16.msra.mxu0 0
    %485 = vmatprep.subr.bf16.mxu0 0
    %486 = vmatpush2.bf16.msra.mxu0 0
    %487 = vmatprep.subr.bf16.mxu0 0
    %488 = vmatpush2.bf16.msra.mxu0 0
    %489 = vmatprep.mubr.bf16.mxu0 0
    %490 = vmatmul.mubr.bf16.gmra.mxu0 %v455
    %v491 = vpop.f32.mrf.mxu0
    %v492 = vadd.f32 %v440, %v491
    %v493 = vpop.f32.mrf.mxu0
    %v494 = vpop.f32.mrf.mxu0
    %v495 = vadd.f32 %v440, %v494
    %v496 = vpop.f32.mrf.mxu0
    %497 = vdwg.mxu0
    %498 = vst [vmem:[#allocation17] sm:$0xff] %v492
    %499 = vst [vmem:[#allocation17 + $0x8] sm:$0xff] %v495
    // Predicated region
    $region82: #{tpu_custom_call.1} parent=1 // pred_check
      _
    $region83: #{tpu_custom_call.1} parent=1 // pred_check_branch
      %501 = sbr.rel (0) target = $region85
    $region84: #{tpu_custom_call.1} parent=1 // pred_region
      %s503 = ssub.s32 256, 256
      %504 = vsyncadd [#allocation4], %s503
      %s505 = sshll.u32 [#allocation17], 4
      %s506 = int_to_ptr.vmem [resolvable:$true] %s505
      %511 = dma.vmem_to_hbm [thread:$0]  %s506, 256, %s11, [#allocation4], 128, 128, 8
    $region85: #{tpu_custom_call.1} parent=1 // pred_fallthru
      _
    // Predicated region
    $region86: #{tpu_custom_call.1} parent=1 // pred_check
      _
    $region87: #{tpu_custom_call.1} parent=1 // pred_check_branch
      %513 = sbr.rel (0) target = $region89
    $region88: #{tpu_custom_call.1} parent=1 // pred_region
      %514 = dma.done [#allocation4], 256
    $region89: #{tpu_custom_call.1} parent=1 // pred_fallthru
      _
    %515 = vsyncpa [#allocation3], 1
    %516 = vsyncpa [#allocation6], 1
    %517 = vsyncpa [#allocation9], 1
    %518 = vsyncpa [#allocation12], 1
    %519 = vsyncpa [#allocation15], 1
    %520 = vsyncpa [#allocation4], 1

</llo_original>
